<compile_context>
chip_gen: v7x
topology: tpu7x:2x2x1
jax: 0.10.0
libtpu: 0.0.40
codegen_flags: <defaults>
</compile_context>

<pallas_src>
import jax
import jax.numpy as jnp
import numpy as np
from jax.experimental import pallas as pl
from jax.experimental.pallas import tpu as pltpu

IN_DIM = 2            # implied by grad_H's final Linear(hidden, 2)
CONTROL_DIM = 1
HIDDEN = 32
OUT_ROWS = 8          # output rows padded 2 -> 8 so the store is a full dense tile
P_ROWS = 3 * HIDDEN + OUT_ROWS + HIDDEN   # 136 rows x 32 lanes parameter slab
_MAX_BM = 4096        # batch columns per block (grid=1 for typical batches)


def _phnode_rhs_kernel(yT_ref, beff_ref, p_ref, out_ref):
    """All tensors live in transposed space: activations are (HIDDEN, bm)."""
    f32 = jnp.float32
    yT = yT_ref[...]                                          # (32, bm): rows 0..1 = y.T, row 2 = 1

    W1T   = p_ref[0:HIDDEN, :]                                # (32, 32) ew1.T | eb1 col | zeros
    WmidT = p_ref[HIDDEN:2 * HIDDEN, :]                       # (32, 32) (ew2 @ gw1).T
    W2T   = p_ref[2 * HIDDEN:3 * HIDDEN, :]                   # (32, 32) gw2.T
    WoutT = p_ref[3 * HIDDEN:3 * HIDDEN + OUT_ROWS, :]        # (8, 32)  rows 0..1 = (gw3 @ A).T
    bcol  = p_ref[3 * HIDDEN + OUT_ROWS:, :]                  # (32, 32) col0 = b_mid, col1 = gb2

    # encoder Linear1 + ReLU (bias folded via the ones-row of yT)
    hT = jnp.maximum(jnp.dot(W1T, yT, preferred_element_type=f32), 0.0)          # (32, bm)
    # encoder Linear2 + grad_H Linear1 fused into one 32x32 matmul
    gT = jnp.maximum(jnp.dot(WmidT, hT, preferred_element_type=f32) + bcol[:, 0:1], 0.0)
    # grad_H Linear2
    gT = jnp.maximum(jnp.dot(W2T, gT, preferred_element_type=f32) + bcol[:, 1:2], 0.0)
    # folded final projection ((J-R)^T, scale, grad_H L3 and control term pre-folded)
    out_ref[...] = jnp.dot(WoutT, gT, preferred_element_type=f32) + beff_ref[...]  # (8, bm)


def prepare_params(params, apply_scale=True):
    """One-time folding + packing of all constants. Call once per parameter update."""
    (ew1, eb1, ew2, eb2, gw1, gb1, gw2, gb2, gw3, gb3, J, R, Bmat, scale) = params

    A = (J - R).T                                   # dz.T = dH.T @ A + (B*u).T
    bt = Bmat.T.reshape(IN_DIM)
    if apply_scale:
        srow = scale.reshape(1, IN_DIM)
        A = A * srow                                # scales output columns of dz.T
        bt = bt * scale.reshape(IN_DIM)

    W_mid = ew2 @ gw1                               # (32, 32) encoder L2 + grad_H L1 fused
    b_mid = (eb2 @ gw1 + gb1).reshape(HIDDEN)       # (32,)
    W_out = gw3 @ A                                 # (32, 2)  grad_H L3 folded with (J-R)^T (*scale)
    b_out = (gb3 @ A).reshape(IN_DIM)               # (2,)

    W1T_pad = jnp.zeros((HIDDEN, HIDDEN), jnp.float32)
    W1T_pad = W1T_pad.at[:, 0:IN_DIM].set(ew1.T)
    W1T_pad = W1T_pad.at[:, IN_DIM].set(eb1.reshape(HIDDEN))   # bias column (matches ones-row of yT)

    WoutT_pad = jnp.zeros((OUT_ROWS, HIDDEN), jnp.float32).at[0:IN_DIM, :].set(W_out.T)

    bcol = jnp.zeros((HIDDEN, HIDDEN), jnp.float32)
    bcol = bcol.at[:, 0].set(b_mid)
    bcol = bcol.at[:, 1].set(gb2.reshape(HIDDEN))

    slab = jnp.concatenate([W1T_pad, W_mid.T, gw2.T, WoutT_pad, bcol], axis=0)   # (136, 32)

    b_out_col = jnp.zeros((OUT_ROWS, 1), jnp.float32).at[0:IN_DIM, 0].set(b_out)
    bt_col = jnp.zeros((OUT_ROWS, 1), jnp.float32).at[0:IN_DIM, 0].set(bt)
    return slab.astype(jnp.float32), b_out_col, bt_col


def _plan(batch):
    """Pad batch to a 128-multiple; one block up to _MAX_BM, else tile at _MAX_BM.

    On v7x, batches > _MAX_BM produce >=2 blocks which shard across both
    TensorCores via the "parallel" grid axis; v5e/v6e prefer a single block.
    """
    bpad = max(128, ((batch + 127) // 128) * 128)
    if bpad <= _MAX_BM:
        return bpad, bpad
    bm = _MAX_BM
    bpad = ((bpad + bm - 1) // bm) * bm
    return bm, bpad


def _pack_y(y, bpad):
    """(batch, 2) -> lane-dense (HIDDEN, bpad) slab with a ones-row for the bias fold."""
    batch = y.shape[0]
    yT = jnp.concatenate([
        y.T.astype(jnp.float32),                              # rows 0..1
        jnp.ones((1, batch), jnp.float32),                    # row 2: folds eb1
        jnp.zeros((HIDDEN - IN_DIM - 1, batch), jnp.float32), # rows 3..31
    ], axis=0)
    if bpad > batch:
        yT = jnp.pad(yT, ((0, 0), (0, bpad - batch)))
    return yT


def latent_phnode_forward(y, u_scalar, prepared):
    """Pallas implementation of LatentPHNODE.forward(t, y, control_input, ..., scale=True).

    `prepared` comes from prepare_params (do it once, not per ODE step).
    """
    slab, b_out_col, bt_col = prepared
    y = jnp.asarray(y, jnp.float32)
    batch = y.shape[0]
    bm, bpad = _plan(batch)
    grid = bpad // bm

    yT = _pack_y(y, bpad)
    b_eff = b_out_col + bt_col * jnp.float32(u_scalar)        # control term folded per call

    outT = pl.pallas_call(
        _phnode_rhs_kernel,
        out_shape=jax.ShapeDtypeStruct((OUT_ROWS, bpad), jnp.float32),
        grid=(grid,),
        in_specs=[
            pl.BlockSpec((HIDDEN, bm), lambda i: (0, i)),       # y slab, lane-dense
            pl.BlockSpec((OUT_ROWS, 1), lambda i: (0, 0)),      # per-call effective bias
            pl.BlockSpec((P_ROWS, HIDDEN), lambda i: (0, 0)),   # param slab, VMEM-resident
        ],
        out_specs=pl.BlockSpec((OUT_ROWS, bm), lambda i: (0, i)),
        compiler_params=pltpu.CompilerParams(dimension_semantics=("parallel",)),
    )(yT, b_eff, slab)

    dzT = outT[0:IN_DIM, 0:batch].T                           # (batch, in_dim)
    return jnp.squeeze(dzT)                                   # matches PyTorch dz.T.squeeze()


def reference_forward(y, u_scalar, params, apply_scale=True):
    """Plain-JAX reference mirroring the PyTorch forward exactly (no folding)."""
    (ew1, eb1, ew2, eb2, gw1, gb1, gw2, gb2, gw3, gb3, J, R, Bmat, scale) = params
    z = jnp.maximum(y @ ew1 + eb1, 0.0) @ ew2 + eb2
    g = jnp.maximum(z @ gw1 + gb1, 0.0)
    g = jnp.maximum(g @ gw2 + gb2, 0.0)
    dH = (g @ gw3 + gb3).T                          # (in_dim, batch)
    dz = (J - R) @ dH + Bmat * u_scalar             # (in_dim, batch)
    if apply_scale:
        dz = dz * scale.reshape(-1, 1)
    return jnp.squeeze(dz.T)


def make_params(key):
    """Deterministic synthetic parameters with the shapes __init__ implies."""
    ks = jax.random.split(key, 16)

    def lin(kw, kb, fan_in, fan_out):
        w = jax.random.normal(kw, (fan_in, fan_out), jnp.float32) * (1.0 / np.sqrt(fan_in))
        b = jax.random.normal(kb, (1, fan_out), jnp.float32) * 0.1
        return w, b

    # encoder: Linear(in, hid), ReLU, Linear(hid, in)
    ew1, eb1 = lin(ks[0], ks[1], IN_DIM, HIDDEN)
    ew2, eb2 = lin(ks[2], ks[3], HIDDEN, IN_DIM)
    # grad_H: Linear(in, hid), ReLU, Linear(hid, hid), ReLU, Linear(hid, 2)
    gw1, gb1 = lin(ks[4], ks[5], IN_DIM, HIDDEN)
    gw2, gb2 = lin(ks[6], ks[7], HIDDEN, HIDDEN)
    gw3, gb3 = lin(ks[8], ks[9], HIDDEN, 2)

    # constant system matrices (constant_parameter=True case)
    Wj = jax.random.normal(ks[10], (IN_DIM, IN_DIM), jnp.float32)
    J = Wj - Wj.T                                   # skew-symmetric
    Wr = jax.random.normal(ks[11], (IN_DIM, IN_DIM), jnp.float32)
    R = 0.1 * (Wr @ Wr.T)                           # symmetric (PSD)
    Bmat = jax.random.normal(ks[12], (IN_DIM, CONTROL_DIM), jnp.float32)
    scale = jax.random.uniform(ks[13], (IN_DIM,), jnp.float32, 0.5, 1.5)
    # TODO(synk): non-constant J/R/B (state-dependent nets on matrix_input(t)) not modeled;
    # the decoder and solve_ode's adaptive dopri5 loop live outside forward() and are not
    # fused into the kernel (stack RK-stage / multi-trajectory RHS evaluations into the
    # batch axis of this call to amortize dispatch overhead).
    return (ew1, eb1, ew2, eb2, gw1, gb1, gw2, gb2, gw3, gb3, J, R, Bmat, scale)


if __name__ == "__main__":
    key = jax.random.PRNGKey(0)
    k_params, k_y1, k_y2 = jax.random.split(key, 3)

    params = make_params(k_params)
    prepared = prepare_params(params, apply_scale=True)       # one-time folding/packing
    u = 0.7                                                   # scalar control input (control_dim = 1)

    # Small batch (a single ODE-step RHS evaluation).
    y_small = jax.random.normal(k_y1, (8, IN_DIM), jnp.float32)
    out_small = jax.block_until_ready(latent_phnode_forward(y_small, u, prepared))
    ref_small = reference_forward(y_small, u, params, apply_scale=True)
    np.testing.assert_allclose(np.asarray(out_small), np.asarray(ref_small),
                               rtol=1e-4, atol=1e-4)

    # Non-multiple-of-128 batch: exercises wrapper-side padding + lane-dense slab path.
    y_big = jax.random.normal(k_y2, (300, IN_DIM), jnp.float32)
    out_big = jax.block_until_ready(latent_phnode_forward(y_big, u, prepared))
    ref_big = reference_forward(y_big, u, params, apply_scale=True)
    np.testing.assert_allclose(np.asarray(out_big), np.asarray(ref_big),
                               rtol=1e-4, atol=1e-4)

    print("KERNEL_OK")
</pallas_src>

<mosaic_0001>
module attributes {stable_mosaic.version = 11 : i64} {
  func.func @_phnode_rhs_kernel(%arg0: i32, %arg1: memref<32x128xf32, #tpu.memory_space<vmem>>, %arg2: memref<8x1xf32, #tpu.memory_space<vmem>>, %arg3: memref<136x32xf32, #tpu.memory_space<vmem>>, %arg4: memref<8x128xf32, #tpu.memory_space<vmem>>) attributes {dimension_semantics = [#tpu.dimension_semantics<parallel>], iteration_bounds = array<i64: 1>, scalar_prefetch = 0 : i64, scratch_operands = 0 : i64, tpu.core_type = #tpu.core_type<tc>, window_params = [{transform_indices = @transform_0, window_bounds = array<i64: 32, 128>}, {pipeline_mode = #tpu.pipeline_mode<synchronous>, transform_indices = @transform_1, window_bounds = array<i64: 8, 1>}, {pipeline_mode = #tpu.pipeline_mode<synchronous>, transform_indices = @transform_2, window_bounds = array<i64: 136, 32>}, {transform_indices = @transform_3, window_bounds = array<i64: 8, 128>}]} {
    %c0 = arith.constant 0 : index
    %c0_0 = arith.constant 0 : index
    %0 = vector.load %arg1[%c0, %c0_0] : memref<32x128xf32, #tpu.memory_space<vmem>>, vector<32x128xf32>
    %c0_1 = arith.constant 0 : index
    %c0_2 = arith.constant 0 : index
    %1 = vector.load %arg3[%c0_1, %c0_2] : memref<136x32xf32, #tpu.memory_space<vmem>>, vector<32x32xf32>
    %c32 = arith.constant 32 : index
    %c0_3 = arith.constant 0 : index
    %2 = vector.load %arg3[%c32, %c0_3] : memref<136x32xf32, #tpu.memory_space<vmem>>, vector<32x32xf32>
    %c64 = arith.constant 64 : index
    %c0_4 = arith.constant 0 : index
    %3 = vector.load %arg3[%c64, %c0_4] : memref<136x32xf32, #tpu.memory_space<vmem>>, vector<32x32xf32>
    %c96 = arith.constant 96 : index
    %c0_5 = arith.constant 0 : index
    %4 = vector.load %arg3[%c96, %c0_5] : memref<136x32xf32, #tpu.memory_space<vmem>>, vector<8x32xf32>
    %c104 = arith.constant 104 : index
    %c0_6 = arith.constant 0 : index
    %5 = vector.load %arg3[%c104, %c0_6] : memref<136x32xf32, #tpu.memory_space<vmem>>, vector<32x32xf32>
    %cst = arith.constant dense<0.000000e+00> : vector<32x128xf32>
    %6 = tpu.matmul %1, %0, %cst {dimension_numbers = #tpu.dot_dimension_numbers<[1], [0], [0], [1], [0, 0, 1, 1], [], []>} : vector<32x32xf32>, vector<32x128xf32>, vector<32x128xf32> -> vector<32x128xf32>
    %cst_7 = arith.constant 0.000000e+00 : f32
    %7 = vector.broadcast %cst_7 : f32 to vector<32x128xf32>
    %8 = arith.maximumf %6, %7 : vector<32x128xf32>
    %cst_8 = arith.constant dense<0.000000e+00> : vector<32x128xf32>
    %9 = tpu.matmul %2, %8, %cst_8 {dimension_numbers = #tpu.dot_dimension_numbers<[1], [0], [0], [1], [0, 0, 1, 1], [], []>} : vector<32x32xf32>, vector<32x128xf32>, vector<32x128xf32> -> vector<32x128xf32>
    %10 = vector.extract_strided_slice %5 {offsets = [0, 0], sizes = [32, 1], strides = [1, 1]} : vector<32x32xf32> to vector<32x1xf32>
    %11 = vector.broadcast %10 : vector<32x1xf32> to vector<32x128xf32>
    %12 = arith.addf %9, %11 : vector<32x128xf32>
    %cst_9 = arith.constant 0.000000e+00 : f32
    %13 = vector.broadcast %cst_9 : f32 to vector<32x128xf32>
    %14 = arith.maximumf %12, %13 : vector<32x128xf32>
    %cst_10 = arith.constant dense<0.000000e+00> : vector<32x128xf32>
    %15 = tpu.matmul %3, %14, %cst_10 {dimension_numbers = #tpu.dot_dimension_numbers<[1], [0], [0], [1], [0, 0, 1, 1], [], []>} : vector<32x32xf32>, vector<32x128xf32>, vector<32x128xf32> -> vector<32x128xf32>
    %16 = vector.extract_strided_slice %5 {offsets = [0, 1], sizes = [32, 1], strides = [1, 1]} : vector<32x32xf32> to vector<32x1xf32>
    %17 = vector.broadcast %16 : vector<32x1xf32> to vector<32x128xf32>
    %18 = arith.addf %15, %17 : vector<32x128xf32>
    %cst_11 = arith.constant 0.000000e+00 : f32
    %19 = vector.broadcast %cst_11 : f32 to vector<32x128xf32>
    %20 = arith.maximumf %18, %19 : vector<32x128xf32>
    %cst_12 = arith.constant dense<0.000000e+00> : vector<8x128xf32>
    %21 = tpu.matmul %4, %20, %cst_12 {dimension_numbers = #tpu.dot_dimension_numbers<[1], [0], [0], [1], [0, 0, 1, 1], [], []>} : vector<8x32xf32>, vector<32x128xf32>, vector<8x128xf32> -> vector<8x128xf32>
    %c0_13 = arith.constant 0 : index
    %c0_14 = arith.constant 0 : index
    %22 = vector.load %arg2[%c0_13, %c0_14] : memref<8x1xf32, #tpu.memory_space<vmem>>, vector<8x1xf32>
    %23 = vector.broadcast %22 : vector<8x1xf32> to vector<8x128xf32>
    %24 = arith.addf %21, %23 : vector<8x128xf32>
    %c0_15 = arith.constant 0 : index
    %c0_16 = arith.constant 0 : index
    %25 = vector.load %arg4[%c0_15, %c0_16] : memref<8x128xf32, #tpu.memory_space<vmem>>, vector<8x128xf32>
    tpu.vector_store %arg4[%c0_15, %c0_16], %24 {strides = array<i32>} : memref<8x128xf32, #tpu.memory_space<vmem>>, vector<8x128xf32>,
    return
  }
  func.func @transform_0(%arg0: i32) -> (i32, i32) {
    %c0_i32 = arith.constant 0 : i32
    %c0_i32_0 = arith.constant 0 : i32
    return %c0_i32, %arg0 : i32, i32
  }
  func.func @transform_1(%arg0: i32) -> (i32, i32) {
    %c0_i32 = arith.constant 0 : i32
    %c0_i32_0 = arith.constant 0 : i32
    %c0_i32_1 = arith.constant 0 : i32
    return %c0_i32, %c0_i32_0 : i32, i32
  }
  func.func @transform_2(%arg0: i32) -> (i32, i32) {
    %c0_i32 = arith.constant 0 : i32
    %c0_i32_0 = arith.constant 0 : i32
    %c0_i32_1 = arith.constant 0 : i32
    return %c0_i32, %c0_i32_0 : i32, i32
  }
  func.func @transform_3(%arg0: i32) -> (i32, i32) {
    %c0_i32 = arith.constant 0 : i32
    %c0_i32_0 = arith.constant 0 : i32
    return %c0_i32, %arg0 : i32, i32
  }
}

</mosaic_0001>

<llo_original>
// kernel: tpu_custom_call.1
$region0: #{tpu_custom_call.1}
  #allocation0 [shape = 'u32[]', space=smem, size = 0x4, offset = 0x4, fixed_abs, tag = 'smem constant byte address 0x4 - core index']
  #allocation1 [shape = 'u32[144,128]{1,0:T(1,128)}', space=vmem, size = 0x12000, scoped, tag = 'internal scratch']
  %s0 = inlined_call_operand.vmem [shape: f32[32,128], index: 0, kind: input, shape index: {}]
  %s1 = inlined_call_operand.vmem [shape: f32[8,1], index: 1, kind: input, shape index: {}]
  %s2 = inlined_call_operand.vmem [shape: f32[136,32], index: 2, kind: input, shape index: {}]
  %s3 = inlined_call_operand.hbm [shape: f32[8,128], index: 3, kind: output, shape index: {}]
  %s4 = sld [smem:[#allocation0]]
  $region22: #{tpu_custom_call.1} parent=0
    _
  %s6 = ssub.s32 1, %s4
  %s7 = scalar_select 0, %s6, %s4
  $region1: #{tpu_custom_call.1} parent=0
    #allocation2 [shape = 'u8[4096]{0}', space=vmem, size = 0x1000, scoped, tag = 'output window, operand 0, single buffered']
    #allocation3 [shape = 's32[1]{0}', space=sflag, size = 0x4, scoped, tag = 'scoped memory for tpu_custom_call.1']
    %8 = vsyncpa [#allocation3], 0
    // Predicated region
    $region2: #{tpu_custom_call.1} parent=1 // pred_check
      _
    $region3: #{tpu_custom_call.1} parent=1 // pred_check_branch
      %10 = sbr.rel (0) target = $region5
    $region4: #{tpu_custom_call.1} parent=1 // pred_region
      _
    $region5: #{tpu_custom_call.1} parent=1 // pred_fallthru
      _
    // Predicated region
    $region6: #{tpu_custom_call.1} parent=1 // pred_check
      _
    $region7: #{tpu_custom_call.1} parent=1 // pred_check_branch
      %12 = sbr.rel (0) target = $region9
    $region8: #{tpu_custom_call.1} parent=1 // pred_region
      _
    $region9: #{tpu_custom_call.1} parent=1 // pred_fallthru
      _
    // Predicated region
    $region10: #{tpu_custom_call.1} parent=1 // pred_check
      _
    $region11: #{tpu_custom_call.1} parent=1 // pred_check_branch
      %14 = sbr.rel (0) target = $region13
    $region12: #{tpu_custom_call.1} parent=1 // pred_region
      _
    $region13: #{tpu_custom_call.1} parent=1 // pred_fallthru
      _
    %v15 = vld [vmem:[%s0] sm:$0xff]
    %v16 = vld [vmem:[%s0 + $0x8] sm:$0xff]
    %v17 = vld [vmem:[%s0 + $0x10] sm:$0xff]
    %v18 = vld [vmem:[%s0 + $0x18] sm:$0xff]
    %v19 = vld [vmem:[%s2] sm:$0xff]
    %v20 = vld [vmem:[%s2 + $0x8] sm:$0xff]
    %v21 = vld [vmem:[%s2 + $0x10] sm:$0xff]
    %v22 = vld [vmem:[%s2 + $0x18] sm:$0xff]
    %v23 = vld [vmem:[%s2 + $0x20] sm:$0xff]
    %v24 = vld [vmem:[%s2 + $0x28] sm:$0xff]
    %v25 = vld [vmem:[%s2 + $0x30] sm:$0xff]
    %v26 = vld [vmem:[%s2 + $0x38] sm:$0xff]
    %v27 = vld [vmem:[%s2 + $0x40] sm:$0xff]
    %v28 = vld [vmem:[%s2 + $0x48] sm:$0xff]
    %v29 = vld [vmem:[%s2 + $0x50] sm:$0xff]
    %v30 = vld [vmem:[%s2 + $0x58] sm:$0xff]
    %v31 = vld [vmem:[%s2 + $0x60] sm:$0xff]
    %v32 = vld [vmem:[%s2 + $0x68] sm:$0xff]
    %v33 = vld [vmem:[%s2 + $0x70] sm:$0xff]
    %v34 = vld [vmem:[%s2 + $0x78] sm:$0xff]
    %v35 = vld [vmem:[%s2 + $0x80] sm:$0xff]
    %vm36 = vcmask 261120
    %v38 = vsel %vm36, %v19, 0
    %v41 = vsel %vm36, %v20, 0
    %v44 = vsel %vm36, %v21, 0
    %v47 = vsel %vm36, %v22, 0
    %49 = vmatprep.subr.mxu0 0.0
    %50 = vmatpush1.msra.mxu0 %v15
    %51 = vmatprep.subr.mxu0 0.0
    %52 = vmatpush1.msra.mxu0 %v16
    %53 = vmatprep.subr.mxu0 0.0
    %54 = vmatpush1.msra.mxu0 %v17
    %55 = vmatprep.subr.mxu0 0.0
    %56 = vmatpush1.msra.mxu0 %v18
    %57 = vmatprep.subr.mxu0 0.0
    %58 = vmatpush1.msra.mxu0 0.0
    %59 = vmatprep.subr.mxu0 0.0
    %60 = vmatpush1.msra.mxu0 0.0
    %61 = vmatprep.subr.mxu0 0.0
    %62 = vmatpush1.msra.mxu0 0.0
    %63 = vmatprep.subr.mxu0 0.0
    %64 = vmatpush1.msra.mxu0 0.0
    %65 = vmatprep.subr.mxu0 0.0
    %66 = vmatpush1.msra.mxu0 0.0
    %67 = vmatprep.subr.mxu0 0.0
    %68 = vmatpush1.msra.mxu0 0.0
    %69 = vmatprep.subr.mxu0 0.0
    %70 = vmatpush1.msra.mxu0 0.0
    %71 = vmatprep.subr.mxu0 0.0
    %72 = vmatpush1.msra.mxu0 0.0
    %73 = vmatprep.subr.mxu0 0.0
    %74 = vmatpush1.msra.mxu0 0.0
    %75 = vmatprep.subr.mxu0 0.0
    %76 = vmatpush1.msra.mxu0 0.0
    %77 = vmatprep.subr.mxu0 0.0
    %78 = vmatpush1.msra.mxu0 0.0
    %79 = vmatprep.subr.mxu0 0.0
    %80 = vmatpush1.msra.mxu0 0.0
    %81 = vmatprep.subr.mxu0 0.0
    %82 = vmatpush1.msra.mxu0 0.0
    %83 = vmatprep.subr.mxu0 0.0
    %84 = vmatpush1.msra.mxu0 0.0
    %85 = vmatprep.subr.mxu0 0.0
    %86 = vmatpush1.msra.mxu0 0.0
    %87 = vmatprep.subr.mxu0 0.0
    %88 = vmatpush1.msra.mxu0 0.0
    %89 = vmatprep.subr.mxu0 0.0
    %90 = vmatpush1.msra.mxu0 0.0
    %91 = vmatprep.subr.mxu0 0.0
    %92 = vmatpush1.msra.mxu0 0.0
    %93 = vmatprep.subr.mxu0 0.0
    %94 = vmatpush1.msra.mxu0 0.0
    %95 = vmatprep.subr.mxu0 0.0
    %96 = vmatpush1.msra.mxu0 0.0
    %97 = vmatprep.subr.mxu0 0.0
    %98 = vmatpush1.msra.mxu0 0.0
    %99 = vmatprep.subr.mxu0 0.0
    %100 = vmatpush1.msra.mxu0 0.0
    %101 = vmatprep.subr.mxu0 0.0
    %102 = vmatpush1.msra.mxu0 0.0
    %103 = vmatprep.subr.mxu0 0.0
    %104 = vmatpush1.msra.mxu0 0.0
    %105 = vmatprep.subr.mxu0 0.0
    %106 = vmatpush1.msra.mxu0 0.0
    %107 = vmatprep.subr.mxu0 0.0
    %108 = vmatpush1.msra.mxu0 0.0
    %109 = vmatprep.subr.mxu0 0.0
    %110 = vmatpush1.msra.mxu0 0.0
    %111 = vmatprep.subr.mxu0 0.0
    %112 = vmatpush1.msra.mxu0 0.0
    %113 = vmatprep.mubr.f32.mxu0 0.0
    %114 = vmatmul.mubr.f32.gmra.mrb[0].mxu0 %v38
    %v115 = vpop.f32.mrb[0].mxu0
    %v116 = vadd.f32 0.0, %v115
    %v117 = vpop.f32.mrb[0].mxu0
    %118 = vmatprep.mubr.f32.mxu0 0.0
    %119 = vmatmul.mubr.f32.gmra.mrb[0].mxu0 %v41
    %v120 = vpop.f32.mrb[0].mxu0
    %v121 = vadd.f32 0.0, %v120
    %v122 = vpop.f32.mrb[0].mxu0
    %123 = vmatprep.mubr.f32.mxu0 0.0
    %124 = vmatmul.mubr.f32.gmra.mrb[0].mxu0 %v44
    %v125 = vpop.f32.mrb[0].mxu0
    %v126 = vadd.f32 0.0, %v125
    %v127 = vpop.f32.mrb[0].mxu0
    %128 = vmatprep.mubr.f32.mxu0 0.0
    %129 = vmatmul.mubr.f32.gmra.mrb[0].mxu0 %v47
    %v130 = vpop.f32.mrb[0].mxu0
    %v131 = vadd.f32 0.0, %v130
    %v132 = vpop.f32.mrb[0].mxu0
    %133 = vdwg.mxu0
    %v134 = vmax.f32 %v116, 0.0
    %v135 = vmax.f32 %v121, 0.0
    %v136 = vmax.f32 %v126, 0.0
    %v137 = vmax.f32 %v131, 0.0
    %139 = vset.pattern.permute.xlu0 0
    %140 = vperm.xlu0 %139, %v32
    %v141 = vpop.permute.xlu0 %140
    %144 = vset.pattern.permute.xlu0 0
    %145 = vperm.xlu0 %144, %v33
    %v146 = vpop.permute.xlu0 %145
    %149 = vset.pattern.permute.xlu0 0
    %150 = vperm.xlu0 %149, %v34
    %v151 = vpop.permute.xlu0 %150
    %154 = vset.pattern.permute.xlu0 0
    %155 = vperm.xlu0 %154, %v35
    %v156 = vpop.permute.xlu0 %155
    %v159 = vsel %vm36, %v23, 0
    %v162 = vsel %vm36, %v24, 0
    %v165 = vsel %vm36, %v25, 0
    %v168 = vsel %vm36, %v26, 0
    %170 = vmatprep.subr.mxu0 0.0
    %171 = vmatpush1.msra.mxu0 %v134
    %172 = vmatprep.subr.mxu0 0.0
    %173 = vmatpush1.msra.mxu0 %v135
    %174 = vmatprep.subr.mxu0 0.0
    %175 = vmatpush1.msra.mxu0 %v136
    %176 = vmatprep.subr.mxu0 0.0
    %177 = vmatpush1.msra.mxu0 %v137
    %178 = vmatprep.subr.mxu0 0.0
    %179 = vmatpush1.msra.mxu0 0.0
    %180 = vmatprep.subr.mxu0 0.0
    %181 = vmatpush1.msra.mxu0 0.0
    %182 = vmatprep.subr.mxu0 0.0
    %183 = vmatpush1.msra.mxu0 0.0
    %184 = vmatprep.subr.mxu0 0.0
    %185 = vmatpush1.msra.mxu0 0.0
    %186 = vmatprep.subr.mxu0 0.0
    %187 = vmatpush1.msra.mxu0 0.0
    %188 = vmatprep.subr.mxu0 0.0
    %189 = vmatpush1.msra.mxu0 0.0
    %190 = vmatprep.subr.mxu0 0.0
    %191 = vmatpush1.msra.mxu0 0.0
    %192 = vmatprep.subr.mxu0 0.0
    %193 = vmatpush1.msra.mxu0 0.0
    %194 = vmatprep.subr.mxu0 0.0
    %195 = vmatpush1.msra.mxu0 0.0
    %196 = vmatprep.subr.mxu0 0.0
    %197 = vmatpush1.msra.mxu0 0.0
    %198 = vmatprep.subr.mxu0 0.0
    %199 = vmatpush1.msra.mxu0 0.0
    %200 = vmatprep.subr.mxu0 0.0
    %201 = vmatpush1.msra.mxu0 0.0
    %202 = vmatprep.subr.mxu0 0.0
    %203 = vmatpush1.msra.mxu0 0.0
    %204 = vmatprep.subr.mxu0 0.0
    %205 = vmatpush1.msra.mxu0 0.0
    %206 = vmatprep.subr.mxu0 0.0
    %207 = vmatpush1.msra.mxu0 0.0
    %208 = vmatprep.subr.mxu0 0.0
    %209 = vmatpush1.msra.mxu0 0.0
    %210 = vmatprep.subr.mxu0 0.0
    %211 = vmatpush1.msra.mxu0 0.0
    %212 = vmatprep.subr.mxu0 0.0
    %213 = vmatpush1.msra.mxu0 0.0
    %214 = vmatprep.subr.mxu0 0.0
    %215 = vmatpush1.msra.mxu0 0.0
    %216 = vmatprep.subr.mxu0 0.0
    %217 = vmatpush1.msra.mxu0 0.0
    %218 = vmatprep.subr.mxu0 0.0
    %219 = vmatpush1.msra.mxu0 0.0
    %220 = vmatprep.subr.mxu0 0.0
    %221 = vmatpush1.msra.mxu0 0.0
    %222 = vmatprep.subr.mxu0 0.0
    %223 = vmatpush1.msra.mxu0 0.0
    %224 = vmatprep.subr.mxu0 0.0
    %225 = vmatpush1.msra.mxu0 0.0
    %226 = vmatprep.subr.mxu0 0.0
    %227 = vmatpush1.msra.mxu0 0.0
    %228 = vmatprep.subr.mxu0 0.0
    %229 = vmatpush1.msra.mxu0 0.0
    %230 = vmatprep.subr.mxu0 0.0
    %231 = vmatpush1.msra.mxu0 0.0
    %232 = vmatprep.subr.mxu0 0.0
    %233 = vmatpush1.msra.mxu0 0.0
    %234 = vmatprep.mubr.f32.mxu0 0.0
    %235 = vmatmul.mubr.f32.gmra.mrb[0].mxu0 %v159
    %v236 = vpop.f32.mrb[0].mxu0
    %v237 = vadd.f32 %v141, %v236
    %v238 = vpop.f32.mrb[0].mxu0
    %239 = vmatprep.mubr.f32.mxu0 0.0
    %240 = vmatmul.mubr.f32.gmra.mrb[0].mxu0 %v162
    %v241 = vpop.f32.mrb[0].mxu0
    %v242 = vadd.f32 %v146, %v241
    %v243 = vpop.f32.mrb[0].mxu0
    %244 = vmatprep.mubr.f32.mxu0 0.0
    %245 = vmatmul.mubr.f32.gmra.mrb[0].mxu0 %v165
    %v246 = vpop.f32.mrb[0].mxu0
    %v247 = vadd.f32 %v151, %v246
    %v248 = vpop.f32.mrb[0].mxu0
    %249 = vmatprep.mubr.f32.mxu0 0.0
    %250 = vmatmul.mubr.f32.gmra.mrb[0].mxu0 %v168
    %v251 = vpop.f32.mrb[0].mxu0
    %v252 = vadd.f32 %v156, %v251
    %v253 = vpop.f32.mrb[0].mxu0
    %254 = vdwg.mxu0
    %v255 = vmax.f32 %v237, 0.0
    %v256 = vmax.f32 %v242, 0.0
    %v257 = vmax.f32 %v247, 0.0
    %v258 = vmax.f32 %v252, 0.0
    %259 = vset.pattern.permute.xlu0 1
    %260 = vperm.xlu0 %259, %v32
    %v261 = vpop.permute.xlu0 %260
    %263 = vset.pattern.permute.xlu0 1
    %264 = vperm.xlu0 %263, %v33
    %v265 = vpop.permute.xlu0 %264
    %267 = vset.pattern.permute.xlu0 1
    %268 = vperm.xlu0 %267, %v34
    %v269 = vpop.permute.xlu0 %268
    %271 = vset.pattern.permute.xlu0 1
    %272 = vperm.xlu0 %271, %v35
    %v273 = vpop.permute.xlu0 %272
    %v276 = vsel %vm36, %v27, 0
    %v279 = vsel %vm36, %v28, 0
    %v282 = vsel %vm36, %v29, 0
    %v285 = vsel %vm36, %v30, 0
    %287 = vmatprep.subr.mxu0 0.0
    %288 = vmatpush1.msra.mxu0 %v255
    %289 = vmatprep.subr.mxu0 0.0
    %290 = vmatpush1.msra.mxu0 %v256
    %291 = vmatprep.subr.mxu0 0.0
    %292 = vmatpush1.msra.mxu0 %v257
    %293 = vmatprep.subr.mxu0 0.0
    %294 = vmatpush1.msra.mxu0 %v258
    %295 = vmatprep.subr.mxu0 0.0
    %296 = vmatpush1.msra.mxu0 0.0
    %297 = vmatprep.subr.mxu0 0.0
    %298 = vmatpush1.msra.mxu0 0.0
    %299 = vmatprep.subr.mxu0 0.0
    %300 = vmatpush1.msra.mxu0 0.0
    %301 = vmatprep.subr.mxu0 0.0
    %302 = vmatpush1.msra.mxu0 0.0
    %303 = vmatprep.subr.mxu0 0.0
    %304 = vmatpush1.msra.mxu0 0.0
    %305 = vmatprep.subr.mxu0 0.0
    %306 = vmatpush1.msra.mxu0 0.0
    %307 = vmatprep.subr.mxu0 0.0
    %308 = vmatpush1.msra.mxu0 0.0
    %309 = vmatprep.subr.mxu0 0.0
    %310 = vmatpush1.msra.mxu0 0.0
    %311 = vmatprep.subr.mxu0 0.0
    %312 = vmatpush1.msra.mxu0 0.0
    %313 = vmatprep.subr.mxu0 0.0
    %314 = vmatpush1.msra.mxu0 0.0
    %315 = vmatprep.subr.mxu0 0.0
    %316 = vmatpush1.msra.mxu0 0.0
    %317 = vmatprep.subr.mxu0 0.0
    %318 = vmatpush1.msra.mxu0 0.0
    %319 = vmatprep.subr.mxu0 0.0
    %320 = vmatpush1.msra.mxu0 0.0
    %321 = vmatprep.subr.mxu0 0.0
    %322 = vmatpush1.msra.mxu0 0.0
    %323 = vmatprep.subr.mxu0 0.0
    %324 = vmatpush1.msra.mxu0 0.0
    %325 = vmatprep.subr.mxu0 0.0
    %326 = vmatpush1.msra.mxu0 0.0
    %327 = vmatprep.subr.mxu0 0.0
    %328 = vmatpush1.msra.mxu0 0.0
    %329 = vmatprep.subr.mxu0 0.0
    %330 = vmatpush1.msra.mxu0 0.0
    %331 = vmatprep.subr.mxu0 0.0
    %332 = vmatpush1.msra.mxu0 0.0
    %333 = vmatprep.subr.mxu0 0.0
    %334 = vmatpush1.msra.mxu0 0.0
    %335 = vmatprep.subr.mxu0 0.0
    %336 = vmatpush1.msra.mxu0 0.0
    %337 = vmatprep.subr.mxu0 0.0
    %338 = vmatpush1.msra.mxu0 0.0
    %339 = vmatprep.subr.mxu0 0.0
    %340 = vmatpush1.msra.mxu0 0.0
    %341 = vmatprep.subr.mxu0 0.0
    %342 = vmatpush1.msra.mxu0 0.0
    %343 = vmatprep.subr.mxu0 0.0
    %344 = vmatpush1.msra.mxu0 0.0
    %345 = vmatprep.subr.mxu0 0.0
    %346 = vmatpush1.msra.mxu0 0.0
    %347 = vmatprep.subr.mxu0 0.0
    %348 = vmatpush1.msra.mxu0 0.0
    %349 = vmatprep.subr.mxu0 0.0
    %350 = vmatpush1.msra.mxu0 0.0
    %351 = vmatprep.mubr.f32.mxu0 0.0
    %352 = vmatmul.mubr.f32.gmra.mrb[0].mxu0 %v276
    %v353 = vpop.f32.mrb[0].mxu0
    %v354 = vadd.f32 %v261, %v353
    %v355 = vpop.f32.mrb[0].mxu0
    %356 = vmatprep.mubr.f32.mxu0 0.0
    %357 = vmatmul.mubr.f32.gmra.mrb[0].mxu0 %v279
    %v358 = vpop.f32.mrb[0].mxu0
    %v359 = vadd.f32 %v265, %v358
    %v360 = vpop.f32.mrb[0].mxu0
    %361 = vmatprep.mubr.f32.mxu0 0.0
    %362 = vmatmul.mubr.f32.gmra.mrb[0].mxu0 %v282
    %v363 = vpop.f32.mrb[0].mxu0
    %v364 = vadd.f32 %v269, %v363
    %v365 = vpop.f32.mrb[0].mxu0
    %366 = vmatprep.mubr.f32.mxu0 0.0
    %367 = vmatmul.mubr.f32.gmra.mrb[0].mxu0 %v285
    %v368 = vpop.f32.mrb[0].mxu0
    %v369 = vadd.f32 %v273, %v368
    %v370 = vpop.f32.mrb[0].mxu0
    %371 = vdwg.mxu0
    %v372 = vmax.f32 %v354, 0.0
    %v373 = vmax.f32 %v359, 0.0
    %v374 = vmax.f32 %v364, 0.0
    %v375 = vmax.f32 %v369, 0.0
    %v376 = vld [vmem:[%s1] sm:$0xff]
    %378 = vset.pattern.permute.xlu0 0
    %379 = vperm.xlu0 %378, %v376
    %v380 = vpop.permute.xlu0 %379
    %v383 = vsel %vm36, %v31, 0
    %385 = vmatprep.subr.mxu0 0.0
    %386 = vmatpush1.msra.mxu0 %v372
    %387 = vmatprep.subr.mxu0 0.0
    %388 = vmatpush1.msra.mxu0 %v373
    %389 = vmatprep.subr.mxu0 0.0
    %390 = vmatpush1.msra.mxu0 %v374
    %391 = vmatprep.subr.mxu0 0.0
    %392 = vmatpush1.msra.mxu0 %v375
    %393 = vmatprep.subr.mxu0 0.0
    %394 = vmatpush1.msra.mxu0 0.0
    %395 = vmatprep.subr.mxu0 0.0
    %396 = vmatpush1.msra.mxu0 0.0
    %397 = vmatprep.subr.mxu0 0.0
    %398 = vmatpush1.msra.mxu0 0.0
    %399 = vmatprep.subr.mxu0 0.0
    %400 = vmatpush1.msra.mxu0 0.0
    %401 = vmatprep.subr.mxu0 0.0
    %402 = vmatpush1.msra.mxu0 0.0
    %403 = vmatprep.subr.mxu0 0.0
    %404 = vmatpush1.msra.mxu0 0.0
    %405 = vmatprep.subr.mxu0 0.0
    %406 = vmatpush1.msra.mxu0 0.0
    %407 = vmatprep.subr.mxu0 0.0
    %408 = vmatpush1.msra.mxu0 0.0
    %409 = vmatprep.subr.mxu0 0.0
    %410 = vmatpush1.msra.mxu0 0.0
    %411 = vmatprep.subr.mxu0 0.0
    %412 = vmatpush1.msra.mxu0 0.0
    %413 = vmatprep.subr.mxu0 0.0
    %414 = vmatpush1.msra.mxu0 0.0
    %415 = vmatprep.subr.mxu0 0.0
    %416 = vmatpush1.msra.mxu0 0.0
    %417 = vmatprep.subr.mxu0 0.0
    %418 = vmatpush1.msra.mxu0 0.0
    %419 = vmatprep.subr.mxu0 0.0
    %420 = vmatpush1.msra.mxu0 0.0
    %421 = vmatprep.subr.mxu0 0.0
    %422 = vmatpush1.msra.mxu0 0.0
    %423 = vmatprep.subr.mxu0 0.0
    %424 = vmatpush1.msra.mxu0 0.0
    %425 = vmatprep.subr.mxu0 0.0
    %426 = vmatpush1.msra.mxu0 0.0
    %427 = vmatprep.subr.mxu0 0.0
    %428 = vmatpush1.msra.mxu0 0.0
    %429 = vmatprep.subr.mxu0 0.0
    %430 = vmatpush1.msra.mxu0 0.0
    %431 = vmatprep.subr.mxu0 0.0
    %432 = vmatpush1.msra.mxu0 0.0
    %433 = vmatprep.subr.mxu0 0.0
    %434 = vmatpush1.msra.mxu0 0.0
    %435 = vmatprep.subr.mxu0 0.0
    %436 = vmatpush1.msra.mxu0 0.0
    %437 = vmatprep.subr.mxu0 0.0
    %438 = vmatpush1.msra.mxu0 0.0
    %439 = vmatprep.subr.mxu0 0.0
    %440 = vmatpush1.msra.mxu0 0.0
    %441 = vmatprep.subr.mxu0 0.0
    %442 = vmatpush1.msra.mxu0 0.0
    %443 = vmatprep.subr.mxu0 0.0
    %444 = vmatpush1.msra.mxu0 0.0
    %445 = vmatprep.subr.mxu0 0.0
    %446 = vmatpush1.msra.mxu0 0.0
    %447 = vmatprep.subr.mxu0 0.0
    %448 = vmatpush1.msra.mxu0 0.0
    %449 = vmatprep.mubr.f32.mxu0 0.0
    %450 = vmatmul.mubr.f32.gmra.mrb[0].mxu0 %v383
    %v451 = vpop.f32.mrb[0].mxu0
    %v452 = vadd.f32 %v380, %v451
    %v453 = vpop.f32.mrb[0].mxu0
    %454 = vdwg.mxu0
    %455 = vst [vmem:[#allocation2] sm:$0xff] %v452
    // Predicated region
    $region14: #{tpu_custom_call.1} parent=1 // pred_check
      _
    $region15: #{tpu_custom_call.1} parent=1 // pred_check_branch
      %457 = sbr.rel (0) target = $region17
    $region16: #{tpu_custom_call.1} parent=1 // pred_region
      %s459 = ssub.s32 128, 128
      %460 = vsyncadd [#allocation3], %s459
      %s462 = sshll.u32 [#allocation2], 4
      %s463 = int_to_ptr.vmem [resolvable:$true] %s462
      %465 = dma.vmem_to_hbm [thread:$0]  %s463, 128, %s3, [#allocation3]
    $region17: #{tpu_custom_call.1} parent=1 // pred_fallthru
      _
    // Predicated region
    $region18: #{tpu_custom_call.1} parent=1 // pred_check
      _
    $region19: #{tpu_custom_call.1} parent=1 // pred_check_branch
      %467 = sbr.rel (0) target = $region21
    $region20: #{tpu_custom_call.1} parent=1 // pred_region
      %468 = dma.done [#allocation3], 128
    $region21: #{tpu_custom_call.1} parent=1 // pred_fallthru
      _
    %469 = vsyncpa [#allocation3], 1

</llo_original>
